<compile_context>
chip_gen: v7x
topology: tpu7x:2x2x1
jax: 0.10.0
libtpu: 0.0.40
codegen_flags: <defaults>
</compile_context>

<pallas_src>
import math
import jax
import jax.numpy as jnp
from jax.experimental import pallas as pl
from jax.experimental.pallas import tpu as pltpu


def _gelu_tanh(x):
    # exact match of torch.nn.GELU(approximate='tanh'), evaluated in f32
    # TODO(synk): on v6e/v7x a bf16 tanh roughly doubles EUP throughput; kept
    # f32 here so v5e (no bf16 EUP path) and the reference tolerance are safe.
    c = math.sqrt(2.0 / math.pi)
    return 0.5 * x * (1.0 + jnp.tanh(c * (x + 0.044715 * x * x * x)))


def _round_up(x, m):
    return (x + m - 1) // m * m


def _mlp_kernel(x_ref, w1_ref, w2_ref, out_ref):
    # x_ref : (tm, Cp) f32   w1_ref : (Cp, Hp) bf16   w2_ref : (Hp, Hp) bf16
    # out_ref: (tm, Hp) out_dtype
    x = x_ref[...].astype(jnp.bfloat16)                                       # in-kernel cast
    h = jnp.dot(x, w1_ref[...], preferred_element_type=jnp.float32)           # MXU, f32 acc
    h = _gelu_tanh(h)                                                         # f32 VPU/EUP
    out_ref[...] = jnp.dot(h.astype(jnp.bfloat16), w2_ref[...],
                           preferred_element_type=jnp.float32).astype(out_ref.dtype)


def pack_weights(params):
    """Pre-pad and pre-cast W1/W2 to bf16 once (do NOT redo this per call)."""
    C, H = params["w1"].shape
    Cp = _round_up(C, 128)
    Hp = _round_up(H, 128)
    w1p = jnp.pad(params["w1"], ((0, Cp - C), (0, Hp - H))).astype(jnp.bfloat16)
    w2p = jnp.pad(params["w2"], ((0, Hp - H), (0, Hp - H))).astype(jnp.bfloat16)
    return {"w1p": w1p, "w2p": w2p, "C": C, "H": H, "Cp": Cp, "Hp": Hp}


def caption_embedder_forward(caption, params, *, uncond_prob, train,
                             force_drop_ids=None, drop_key=None,
                             packed=None, tile_m=512, out_dtype=jnp.float32):
    """caption: (B, T, C) float32. Returns (B, T, H) in out_dtype."""
    B, T, C = caption.shape
    H = params["w1"].shape[1]

    # ---- classifier-free guidance drop (wrapper-side, cheap & mem-bound) ----
    use_dropout = uncond_prob > 0
    if (train and use_dropout) or (force_drop_ids is not None):
        assert params["uncond_embedding"].shape == (T, C), (
            f"uncond_embedding {params['uncond_embedding'].shape} must be ({T}, {C})")
        if force_drop_ids is None:
            drop = jax.random.uniform(drop_key, (B,)) < uncond_prob
        else:
            drop = force_drop_ids == 1
        caption = jnp.where(drop[:, None, None], params["uncond_embedding"], caption)

    # ---- pre-packed bf16 padded weights (pack once, reuse every call) ----
    if packed is None:
        packed = pack_weights(params)
    Cp, Hp = packed["Cp"], packed["Hp"]
    w1p, w2p = packed["w1p"], packed["w2p"]

    # ---- fold batch into matmul M dim, pad to TPU-friendly shapes ----
    M = B * T
    Mp8 = _round_up(M, 8)
    tm = min(tile_m, Mp8)
    # v7x megacore: guarantee >= 2 grid steps whenever M allows, so the
    # "parallel" M axis actually shards across both TensorCores.
    if Mp8 >= 16 and pl.cdiv(Mp8, tm) < 2:
        tm = _round_up(pl.cdiv(Mp8, 2), 8)
    Mp = _round_up(Mp8, tm)
    grid = (Mp // tm,)

    x = caption.reshape(M, C).astype(jnp.float32)
    if (Mp - M) or (Cp - C):
        x = jnp.pad(x, ((0, Mp - M), (0, Cp - C)))

    out_itemsize = jnp.dtype(out_dtype).itemsize

    # ---- VMEM budget derived from the actual resident buffers (+ margin) ----
    w_bytes = (Cp * Hp + Hp * Hp) * 2            # single-buffered bf16 weights
    x_bytes = 2 * tm * Cp * 4                    # double-buffered f32 x tiles
    o_bytes = 2 * tm * Hp * out_itemsize         # double-buffered output tiles
    scratch = tm * Hp * 4                        # f32 GELU intermediate spill
    vmem_limit = int(min(max(w_bytes + x_bytes + o_bytes + scratch + (8 << 20),
                             32 << 20), 100 << 20))

    cost = pl.CostEstimate(
        flops=2 * Mp * (Cp * Hp + Hp * Hp),
        transcendentals=Mp * Hp,                 # one tanh per hidden activation
        bytes_accessed=(Mp * Cp * 4 + Cp * Hp * 2 + Hp * Hp * 2
                        + Mp * Hp * out_itemsize),
    )

    out = pl.pallas_call(
        _mlp_kernel,
        out_shape=jax.ShapeDtypeStruct((Mp, Hp), out_dtype),
        grid=grid,
        in_specs=[
            pl.BlockSpec((tm, Cp), lambda i: (i, 0)),                 # x tile marches down M
            pl.BlockSpec((Cp, Hp), lambda i: (0, 0),
                         pipeline_mode=pl.Buffered(1)),               # W1: constant, 1 buffer
            pl.BlockSpec((Hp, Hp), lambda i: (0, 0),
                         pipeline_mode=pl.Buffered(1)),               # W2: constant, 1 buffer
        ],
        out_specs=pl.BlockSpec((tm, Hp), lambda i: (i, 0)),
        compiler_params=pltpu.CompilerParams(
            dimension_semantics=("parallel",),    # M tiles shard across megacore TCs
            vmem_limit_bytes=vmem_limit,
        ),
        cost_estimate=cost,
    )(x, w1p, w2p)

    return out[:M, :H].reshape(B, T, H)


def init_params(key, in_channels, hidden_size, token_num):
    k1, k2, k3 = jax.random.split(key, 3)
    # torch stores Linear weight as (out, in); we keep the (in, out) transpose.
    w1 = jax.random.normal(k1, (in_channels, hidden_size), jnp.float32) * 0.02
    w2 = jax.random.normal(k2, (hidden_size, hidden_size), jnp.float32) * 0.02
    uncond = jax.random.normal(k3, (token_num, in_channels), jnp.float32) / math.sqrt(in_channels)
    return {"w1": w1, "w2": w2, "uncond_embedding": uncond}


def _reference_forward(caption, params, uncond_prob, train, force_drop_ids, drop_key):
    B = caption.shape[0]
    if (train and uncond_prob > 0) or (force_drop_ids is not None):
        if force_drop_ids is None:
            drop = jax.random.uniform(drop_key, (B,)) < uncond_prob
        else:
            drop = force_drop_ids == 1
        caption = jnp.where(drop[:, None, None], params["uncond_embedding"], caption)
    h = _gelu_tanh(caption @ params["w1"])
    return h @ params["w2"]


if __name__ == "__main__":
    B, T, C, H = 2, 8, 32, 64           # batch, token_num, in_channels, hidden_size
    uncond_prob = 0.1

    key = jax.random.PRNGKey(0)
    kp, kc, kd = jax.random.split(key, 3)
    params = init_params(kp, C, H, T)
    packed = pack_weights(params)       # one-time bf16 pad/cast of the weights
    caption = jax.random.normal(kc, (B, T, C), jnp.float32)
    # deterministic forced drop: keep batch element 0, drop batch element 1
    force_drop_ids = jnp.array([0, 1], dtype=jnp.int32)

    out = caption_embedder_forward(caption, params, uncond_prob=uncond_prob,
                                   train=True, force_drop_ids=force_drop_ids,
                                   drop_key=kd, packed=packed)
    out = jax.block_until_ready(out)

    ref = _reference_forward(caption, params, uncond_prob, True, force_drop_ids, kd)
    assert out.shape == (B, T, H)
    # bf16 MXU operands with f32 accumulation -> relaxed tolerance vs f32 reference
    assert jnp.allclose(out, ref, atol=5e-3, rtol=5e-2), \
        f"max abs err {jnp.max(jnp.abs(out - ref))}"

    print("KERNEL_OK")
</pallas_src>

<mosaic_0001>
module attributes {stable_mosaic.version = 11 : i64} {
  func.func @_mlp_kernel(%arg0: i32, %arg1: memref<8x128xf32, #tpu.memory_space<vmem>>, %arg2: memref<128x128xbf16, #tpu.memory_space<vmem>>, %arg3: memref<128x128xbf16, #tpu.memory_space<vmem>>, %arg4: memref<8x128xf32, #tpu.memory_space<vmem>>) attributes {dimension_semantics = [#tpu.dimension_semantics<parallel>], iteration_bounds = array<i64: 2>, scalar_prefetch = 0 : i64, scratch_operands = 0 : i64, tpu.core_type = #tpu.core_type<tc>, window_params = [{transform_indices = @transform_0, window_bounds = array<i64: 8, 128>}, {pipeline_mode = #tpu.pipeline_mode<synchronous>, transform_indices = @transform_1, window_bounds = array<i64: 128, 128>}, {pipeline_mode = #tpu.pipeline_mode<synchronous>, transform_indices = @transform_2, window_bounds = array<i64: 128, 128>}, {transform_indices = @transform_3, window_bounds = array<i64: 8, 128>}]} {
    %c0 = arith.constant 0 : index
    %c0_0 = arith.constant 0 : index
    %0 = vector.load %arg1[%c0, %c0_0] : memref<8x128xf32, #tpu.memory_space<vmem>>, vector<8x128xf32>
    %1 = arith.truncf %0 : vector<8x128xf32> to vector<8x128xbf16>
    %c0_1 = arith.constant 0 : index
    %c0_2 = arith.constant 0 : index
    %2 = vector.load %arg2[%c0_1, %c0_2] : memref<128x128xbf16, #tpu.memory_space<vmem>>, vector<128x128xbf16>
    %cst = arith.constant dense<0.000000e+00> : vector<8x128xf32>
    %3 = tpu.matmul %1, %2, %cst {dimension_numbers = #tpu.dot_dimension_numbers<[1], [0], [0], [1], [0, 0, 1, 1], [], []>} : vector<8x128xbf16>, vector<128x128xbf16>, vector<8x128xf32> -> vector<8x128xf32>
    %cst_3 = arith.constant 5.000000e-01 : f32
    %4 = vector.broadcast %cst_3 : f32 to vector<8x128xf32>
    %5 = arith.mulf %4, %3 : vector<8x128xf32>
    %cst_4 = arith.constant 4.471500e-02 : f32
    %6 = vector.broadcast %cst_4 : f32 to vector<8x128xf32>
    %7 = arith.mulf %6, %3 : vector<8x128xf32>
    %8 = arith.mulf %7, %3 : vector<8x128xf32>
    %9 = arith.mulf %8, %3 : vector<8x128xf32>
    %10 = arith.addf %3, %9 : vector<8x128xf32>
    %cst_5 = arith.constant 0.797884583 : f32
    %11 = vector.broadcast %cst_5 : f32 to vector<8x128xf32>
    %12 = arith.mulf %11, %10 : vector<8x128xf32>
    %13 = math.tanh %12 : vector<8x128xf32>
    %cst_6 = arith.constant 1.000000e+00 : f32
    %14 = vector.broadcast %cst_6 : f32 to vector<8x128xf32>
    %15 = arith.addf %14, %13 : vector<8x128xf32>
    %16 = arith.mulf %5, %15 : vector<8x128xf32>
    %17 = arith.truncf %16 : vector<8x128xf32> to vector<8x128xbf16>
    %c0_7 = arith.constant 0 : index
    %c0_8 = arith.constant 0 : index
    %18 = vector.load %arg3[%c0_7, %c0_8] : memref<128x128xbf16, #tpu.memory_space<vmem>>, vector<128x128xbf16>
    %cst_9 = arith.constant dense<0.000000e+00> : vector<8x128xf32>
    %19 = tpu.matmul %17, %18, %cst_9 {dimension_numbers = #tpu.dot_dimension_numbers<[1], [0], [0], [1], [0, 0, 1, 1], [], []>} : vector<8x128xbf16>, vector<128x128xbf16>, vector<8x128xf32> -> vector<8x128xf32>
    %c0_10 = arith.constant 0 : index
    %c0_11 = arith.constant 0 : index
    %20 = vector.load %arg4[%c0_10, %c0_11] : memref<8x128xf32, #tpu.memory_space<vmem>>, vector<8x128xf32>
    tpu.vector_store %arg4[%c0_10, %c0_11], %19 {strides = array<i32>} : memref<8x128xf32, #tpu.memory_space<vmem>>, vector<8x128xf32>,
    return
  }
  func.func @transform_0(%arg0: i32) -> (i32, i32) {
    %c0_i32 = arith.constant 0 : i32
    %c0_i32_0 = arith.constant 0 : i32
    return %arg0, %c0_i32 : i32, i32
  }
  func.func @transform_1(%arg0: i32) -> (i32, i32) {
    %c0_i32 = arith.constant 0 : i32
    %c0_i32_0 = arith.constant 0 : i32
    %c0_i32_1 = arith.constant 0 : i32
    return %c0_i32, %c0_i32_0 : i32, i32
  }
  func.func @transform_2(%arg0: i32) -> (i32, i32) {
    %c0_i32 = arith.constant 0 : i32
    %c0_i32_0 = arith.constant 0 : i32
    %c0_i32_1 = arith.constant 0 : i32
    return %c0_i32, %c0_i32_0 : i32, i32
  }
  func.func @transform_3(%arg0: i32) -> (i32, i32) {
    %c0_i32 = arith.constant 0 : i32
    %c0_i32_0 = arith.constant 0 : i32
    return %arg0, %c0_i32 : i32, i32
  }
}

</mosaic_0001>

<llo_original>
// kernel: tpu_custom_call.1
$region0: #{tpu_custom_call.1}
  #allocation0 [shape = 'u32[]', space=smem, size = 0x4, offset = 0x4, fixed_abs, tag = 'smem constant byte address 0x4 - core index']
  #allocation1 [shape = 'u32[144,128]{1,0:T(1,128)}', space=vmem, size = 0x12000, scoped, tag = 'internal scratch']
  %s0 = inlined_call_operand.hbm [shape: f32[16,128], index: 0, kind: input, shape index: {}]
  %s1 = inlined_call_operand.hbm [shape: bf16[128,128], index: 1, kind: input, shape index: {}]
  %s2 = inlined_call_operand.hbm [shape: bf16[128,128], index: 2, kind: input, shape index: {}]
  %s3 = inlined_call_operand.hbm [shape: f32[16,128], index: 3, kind: output, shape index: {}]
  %s4 = sld [smem:[#allocation0]]
  $region57: #{tpu_custom_call.1} parent=0
    _
  %s6 = ssub.s32 1, %s4
  %s7 = scalar_select 0, %s6, %s4
  $region1: #{tpu_custom_call.1} parent=0
    #allocation2 [shape = 'u8[8192]{0}', space=vmem, size = 0x2000, scoped, tag = 'input window, operand 0']
    #allocation3 [shape = 's32[2]{0}', space=sflag, size = 0x8, scoped, tag = 'scoped memory for tpu_custom_call.1']
    #allocation4 [shape = 's32[2]{0}', space=sflag, size = 0x8, scoped, tag = 'scoped memory for tpu_custom_call.1']
    #allocation5 [shape = 'u8[32768]{0}', space=vmem, size = 0x8000, scoped, tag = 'input window, operand 1, single buffered']
    #allocation6 [shape = 's32[1]{0}', space=sflag, size = 0x4, scoped, tag = 'scoped memory for tpu_custom_call.1']
    #allocation7 [shape = 'u8[32768]{0}', space=vmem, size = 0x8000, scoped, tag = 'input window, operand 2, single buffered']
    #allocation8 [shape = 'u8[8192]{0}', space=vmem, size = 0x2000, scoped, tag = 'output window, operand 0']
    %8 = vsyncpa [#allocation3], 0
    %s9 = scalar_lea.sflag [#allocation3], 1
    %10 = vsyncpa %s9, 0
    %11 = vsyncpa [#allocation6], 0
    %12 = vsyncpa [#allocation4], 0
    %s13 = scalar_lea.sflag [#allocation4], 1
    %14 = vsyncpa %s13, 0
    loop: start=0, step=1, limit=4
    $region2: #{tpu_custom_call.1} parent=1 // loop_pre_header
      _
    $region3: #{tpu_custom_call.1} parent=1 // loop_header
      %s16 = sphi 0, %s20
      %p17 = scmp.ge.s32.totalorder %s16, 4
      %s26 = sphi 0, %s28
      %s29 = sphi 0, %s26
      %s30 = sphi 0, %s29
      %s46 = sphi 0, %s30
      %s50 = sphi 0, %s50
      %s52 = sphi 0, %s50
      %s53 = sphi 0, %s52
      %s67 = sphi 0, %s53
      %s71 = sphi 0, %s71
      %s73 = sphi 0, %s71
      %s74 = sphi 0, %s73
      %s88 = sphi 0, %s74
      %s94 = sphi 0, %s96
      %s97 = sphi 0, %s94
      %s98 = sphi 0, %s97
      %s114 = sphi 0, %s98
    $region4: #{tpu_custom_call.1} parent=1 // loop_header_branch
      %19 = sbr.rel (%p17) target = $region8
    $region5: #{tpu_custom_call.1} parent=1 // loop_body
      %s21 = ssub.s32 %s16, 1
      %s22 = ssub.s32 %s16, 2
      %s23 = sadd.s32 %s16, 1
      %s24 = ssub.s32 %s16, %s23
      %p25 = scmp.eq.s32.totalorder %s24, 0
      %s27 = sadd.s32 %s26, 1
      %s28 = scalar_select %p25, %s26, %s27
      %p31 = pneg %p25
      %p32 = scmp.eq.s32.totalorder %s16, 1
      %p33 = por %p31, %p32
      %p34 = scmp.ne.s32.totalorder %s26, %s29
      %p35 = scmp.eq.s32.totalorder %s16, 0
      %p36 = por %p34, %p35
      %p37 = scmp.ne.s32.totalorder %s26, %s29
      %p38 = scmp.eq.s32.totalorder %s21, 1
      %p39 = por %p37, %p38
      %p40 = scmp.ne.s32.totalorder %s29, %s30
      %p41 = scmp.eq.s32.totalorder %s21, 0
      %p42 = por %p40, %p41
      %p43 = scmp.ne.s32.totalorder %s29, %s30
      %p44 = scmp.eq.s32.totalorder %s22, 1
      %p45 = por %p43, %p44
      %p47 = scmp.ne.s32.totalorder %s30, %s46
      %p48 = scmp.eq.s32.totalorder %s22, 0
      %p49 = por %p47, %p48
      %s51 = sadd.s32 %s50, 1
      %p54 = scmp.eq.s32.totalorder %s16, 1
      %p55 = scmp.ne.s32.totalorder %s50, %s52
      %p56 = scmp.eq.s32.totalorder %s16, 0
      %p57 = por %p55, %p56
      %p58 = scmp.ne.s32.totalorder %s50, %s52
      %p59 = scmp.eq.s32.totalorder %s21, 1
      %p60 = por %p58, %p59
      %p61 = scmp.ne.s32.totalorder %s52, %s53
      %p62 = scmp.eq.s32.totalorder %s21, 0
      %p63 = por %p61, %p62
      %p64 = scmp.ne.s32.totalorder %s52, %s53
      %p65 = scmp.eq.s32.totalorder %s22, 1
      %p66 = por %p64, %p65
      %p68 = scmp.ne.s32.totalorder %s53, %s67
      %p69 = scmp.eq.s32.totalorder %s22, 0
      %p70 = por %p68, %p69
      %s72 = sadd.s32 %s71, 1
      %p75 = scmp.eq.s32.totalorder %s16, 1
      %p76 = scmp.ne.s32.totalorder %s71, %s73
      %p77 = scmp.eq.s32.totalorder %s16, 0
      %p78 = por %p76, %p77
      %p79 = scmp.ne.s32.totalorder %s71, %s73
      %p80 = scmp.eq.s32.totalorder %s21, 1
      %p81 = por %p79, %p80
      %p82 = scmp.ne.s32.totalorder %s73, %s74
      %p83 = scmp.eq.s32.totalorder %s21, 0
      %p84 = por %p82, %p83
      %p85 = scmp.ne.s32.totalorder %s73, %s74
      %p86 = scmp.eq.s32.totalorder %s22, 1
      %p87 = por %p85, %p86
      %p89 = scmp.ne.s32.totalorder %s74, %s88
      %p90 = scmp.eq.s32.totalorder %s22, 0
      %p91 = por %p89, %p90
      %s92 = ssub.s32 %s16, %s23
      %p93 = scmp.eq.s32.totalorder %s92, 0
      %s95 = sadd.s32 %s94, 1
      %s96 = scalar_select %p93, %s94, %s95
      %p99 = pneg %p93
      %p100 = scmp.eq.s32.totalorder %s16, 1
      %p101 = por %p99, %p100
      %p102 = scmp.ne.s32.totalorder %s94, %s97
      %p103 = scmp.eq.s32.totalorder %s16, 0
      %p104 = por %p102, %p103
      %p105 = scmp.ne.s32.totalorder %s94, %s97
      %p106 = scmp.eq.s32.totalorder %s21, 1
      %p107 = por %p105, %p106
      %p108 = scmp.ne.s32.totalorder %s97, %s98
      %p109 = scmp.eq.s32.totalorder %s21, 0
      %p110 = por %p108, %p109
      %p111 = scmp.ne.s32.totalorder %s97, %s98
      %p112 = scmp.eq.s32.totalorder %s22, 1
      %p113 = por %p111, %p112
      %p115 = scmp.ne.s32.totalorder %s98, %s114
      %p116 = scmp.eq.s32.totalorder %s22, 0
      %p117 = por %p115, %p116
      %p118 = scmp.le.s32.totalorder 1, %s16
      %p119 = scmp.lt.s32.totalorder %s16, 3
      %p120 = pnand %p118, %p119
      %p121 = pneg %p120
      // Predicated region
      $region9: #{tpu_custom_call.1} parent=5 // pred_check
        _
      $region10: #{tpu_custom_call.1} parent=5 // pred_check_branch
        %123 = sbr.rel (%p120) target = $region12
      $region11: #{tpu_custom_call.1} parent=5 // pred_region
        %s124 = ssub.s32 %s16, 1
        // Predicated region
        $region13: #{tpu_custom_call.1} parent=11 // pred_check
          %p125 = pneg %p63
        $region14: #{tpu_custom_call.1} parent=11 // pred_check_branch
          %127 = sbr.rel (%p125) target = $region16
        $region15: #{tpu_custom_call.1} parent=11 // pred_region
          %s129 = ssub.s32 1024, 1024
          %130 = vsyncadd [#allocation6], %s129
          %s131 = sshll.u32 [#allocation5], 4
          %s132 = int_to_ptr.vmem [resolvable:$true] %s131
          %137 = dma.hbm_to_vmem [thread:$0]  %s1, 1024, %s132, [#allocation6], 64, 64, 4
        $region16: #{tpu_custom_call.1} parent=11 // pred_fallthru
          _
        // Predicated region
        $region17: #{tpu_custom_call.1} parent=11 // pred_check
          %p138 = pneg %p84
        $region18: #{tpu_custom_call.1} parent=11 // pred_check_branch
          %140 = sbr.rel (%p138) target = $region20
        $region19: #{tpu_custom_call.1} parent=11 // pred_region
          %s142 = ssub.s32 1024, 1024
          %143 = vsyncadd [#allocation6], %s142
          %s144 = sshll.u32 [#allocation7], 4
          %s145 = int_to_ptr.vmem [resolvable:$true] %s144
          %150 = dma.hbm_to_vmem [thread:$0]  %s2, 1024, %s145, [#allocation6], 64, 64, 4
        $region20: #{tpu_custom_call.1} parent=11 // pred_fallthru
          _
      $region12: #{tpu_custom_call.1} parent=5 // pred_fallthru
        _
      %p151 = scmp.lt.s32.totalorder %s16, 2
      // Predicated region
      $region21: #{tpu_custom_call.1} parent=5 // pred_check
        %p152 = pneg %p151
      $region22: #{tpu_custom_call.1} parent=5 // pred_check_branch
        %154 = sbr.rel (%p152) target = $region24
      $region23: #{tpu_custom_call.1} parent=5 // pred_region
        // Predicated region
        $region25: #{tpu_custom_call.1} parent=23 // pred_check
          %p155 = pneg %p36
        $region26: #{tpu_custom_call.1} parent=23 // pred_check_branch
          %157 = sbr.rel (%p155) target = $region28
        $region27: #{tpu_custom_call.1} parent=23 // pred_region
          %s158 = sand.u32 %s26, 1
          %s159 = scalar_lea.sflag [#allocation3], %s158
          %s160 = sand.u32 %s26, 1
          %s161 = smul.addr %s160, 8
          %s162 = scalar_lea.vmem [#allocation2], %s161
          %s164 = ssub.s32 128, 128
          %165 = vsyncadd %s159, %s164
          %s166 = smul.addr %s16, 128
          %s167 = scalar_lea.hbm %s0, %s166
          %s169 = sshll.u32 %s162, 4
          %s170 = int_to_ptr.vmem [resolvable:$true] %s169
          %172 = dma.hbm_to_vmem [thread:$0]  %s167, 128, %s170, %s159
        $region28: #{tpu_custom_call.1} parent=23 // pred_fallthru
          _
      $region24: #{tpu_custom_call.1} parent=5 // pred_fallthru
        _
      %p173 = scmp.le.s32.totalorder 1, %s16
      %p174 = scmp.lt.s32.totalorder %s16, 3
      %p175 = pnand %p173, %p174
      %p176 = pneg %p175
      // Predicated region
      $region29: #{tpu_custom_call.1} parent=5 // pred_check
        _
      $region30: #{tpu_custom_call.1} parent=5 // pred_check_branch
        %178 = sbr.rel (%p175) target = $region32
      $region31: #{tpu_custom_call.1} parent=5 // pred_region
        %s179 = ssub.s32 %s16, 1
        %s180 = sand.u32 %s29, 1
        %s181 = scalar_lea.sflag [#allocation3], %s180
        %s182 = sand.u32 %s29, 1
        %s183 = smul.addr %s182, 8
        %s184 = scalar_lea.vmem [#allocation2], %s183
        // Predicated region
        $region33: #{tpu_custom_call.1} parent=31 // pred_check
          %p185 = pneg %p42
        $region34: #{tpu_custom_call.1} parent=31 // pred_check_branch
          %187 = sbr.rel (%p185) target = $region36
        $region35: #{tpu_custom_call.1} parent=31 // pred_region
          %188 = dma.done %s181, 128
        $region36: #{tpu_custom_call.1} parent=31 // pred_fallthru
          _
        // Predicated region
        $region37: #{tpu_custom_call.1} parent=31 // pred_check
          %p189 = pneg %p63
        $region38: #{tpu_custom_call.1} parent=31 // pred_check_branch
          %191 = sbr.rel (%p189) target = $region40
        $region39: #{tpu_custom_call.1} parent=31 // pred_region
          %192 = dma.done [#allocation6], 1024
        $region40: #{tpu_custom_call.1} parent=31 // pred_fallthru
          _
        // Predicated region
        $region41: #{tpu_custom_call.1} parent=31 // pred_check
          %p193 = pneg %p84
        $region42: #{tpu_custom_call.1} parent=31 // pred_check_branch
          %195 = sbr.rel (%p193) target = $region44
        $region43: #{tpu_custom_call.1} parent=31 // pred_region
          %196 = dma.done [#allocation6], 1024
        $region44: #{tpu_custom_call.1} parent=31 // pred_fallthru
          _
        %s197 = sand.u32 %s29, 1
        %s198 = scalar_lea.sflag [#allocation3], %s197
        %s199 = sand.u32 %s29, 1
        %s200 = smul.addr %s199, 8
        %s201 = scalar_lea.vmem [#allocation2], %s200
        %p202 = pneg %p42
        %p203 = pneg %p39
        %p204 = pneg %p63
        %p205 = pneg %p60
        %p206 = pneg %p84
        %p207 = pneg %p81
        %p208 = pneg %p110
        %p209 = pneg %p107
        %s210 = sand.u32 %s97, 1
        %s211 = scalar_lea.sflag [#allocation4], %s210
        %s212 = sand.u32 %s97, 1
        %s213 = smul.addr %s212, 8
        %s214 = scalar_lea.vmem [#allocation8], %s213
        %v216 = vld [vmem:[%s184] sm:$0xff]
        %v217 = vpack.c.bf16 %v216, %v216
        %v218 = vld [vmem:[#allocation5] sm:$0xf]
        %v219 = vld [vmem:[#allocation5 + $0x4] sm:$0xf]
        %v220 = vld [vmem:[#allocation5 + $0x8] sm:$0xf]
        %v221 = vld [vmem:[#allocation5 + $0xc] sm:$0xf]
        %v222 = vld [vmem:[#allocation5 + $0x10] sm:$0xf]
        %v223 = vld [vmem:[#allocation5 + $0x14] sm:$0xf]
        %v224 = vld [vmem:[#allocation5 + $0x18] sm:$0xf]
        %v225 = vld [vmem:[#allocation5 + $0x1c] sm:$0xf]
        %v226 = vld [vmem:[#allocation5 + $0x20] sm:$0xf]
        %v227 = vld [vmem:[#allocation5 + $0x24] sm:$0xf]
        %v228 = vld [vmem:[#allocation5 + $0x28] sm:$0xf]
        %v229 = vld [vmem:[#allocation5 + $0x2c] sm:$0xf]
        %v230 = vld [vmem:[#allocation5 + $0x30] sm:$0xf]
        %v231 = vld [vmem:[#allocation5 + $0x34] sm:$0xf]
        %v232 = vld [vmem:[#allocation5 + $0x38] sm:$0xf]
        %v233 = vld [vmem:[#allocation5 + $0x3c] sm:$0xf]
        %v250 = vunpack.c.l.b16 %v218
        %v251 = vunpack.c.l.b16 %v219
        %v252 = vunpack.c.l.b16 %v220
        %v253 = vunpack.c.l.b16 %v221
        %v254 = vunpack.c.l.b16 %v222
        %v255 = vunpack.c.l.b16 %v223
        %v256 = vunpack.c.l.b16 %v224
        %v257 = vunpack.c.l.b16 %v225
        %v258 = vunpack.c.l.b16 %v226
        %v259 = vunpack.c.l.b16 %v227
        %v260 = vunpack.c.l.b16 %v228
        %v261 = vunpack.c.l.b16 %v229
        %v262 = vunpack.c.l.b16 %v230
        %v263 = vunpack.c.l.b16 %v231
        %v264 = vunpack.c.l.b16 %v232
        %v265 = vunpack.c.l.b16 %v233
        %v266 = vpack.c.b16 %v251, %v250
        %v267 = vpack.c.b16 %v253, %v252
        %v268 = vpack.c.b16 %v255, %v254
        %v269 = vpack.c.b16 %v257, %v256
        %v270 = vpack.c.b16 %v259, %v258
        %v271 = vpack.c.b16 %v261, %v260
        %v272 = vpack.c.b16 %v263, %v262
        %v273 = vpack.c.b16 %v265, %v264
        %282 = vmatprep.subr.bf16.mxu0 0
        %283 = vmatpush1.bf16.msra.mxu0 %v266
        %284 = vmatprep.subr.bf16.mxu0 0
        %285 = vmatpush1.bf16.msra.mxu0 %v267
        %286 = vmatprep.subr.bf16.mxu0 0
        %287 = vmatpush1.bf16.msra.mxu0 %v268
        %288 = vmatprep.subr.bf16.mxu0 0
        %289 = vmatpush1.bf16.msra.mxu0 %v269
        %290 = vmatprep.subr.bf16.mxu0 0
        %291 = vmatpush1.bf16.msra.mxu0 %v270
        %292 = vmatprep.subr.bf16.mxu0 0
        %293 = vmatpush1.bf16.msra.mxu0 %v271
        %294 = vmatprep.subr.bf16.mxu0 0
        %295 = vmatpush1.bf16.msra.mxu0 %v272
        %296 = vmatprep.subr.bf16.mxu0 0
        %297 = vmatpush1.bf16.msra.mxu0 %v273
        %298 = vmatprep.subr.bf16.mxu0 0
        %299 = vmatpush1.bf16.msra.mxu0 0
        %300 = vmatprep.subr.bf16.mxu0 0
        %301 = vmatpush1.bf16.msra.mxu0 0
        %302 = vmatprep.subr.bf16.mxu0 0
        %303 = vmatpush1.bf16.msra.mxu0 0
        %304 = vmatprep.subr.bf16.mxu0 0
        %305 = vmatpush1.bf16.msra.mxu0 0
        %306 = vmatprep.subr.bf16.mxu0 0
        %307 = vmatpush1.bf16.msra.mxu0 0
        %308 = vmatprep.subr.bf16.mxu0 0
        %309 = vmatpush1.bf16.msra.mxu0 0
        %310 = vmatprep.subr.bf16.mxu0 0
        %311 = vmatpush1.bf16.msra.mxu0 0
        %312 = vmatprep.subr.bf16.mxu0 0
        %313 = vmatpush1.bf16.msra.mxu0 0
        %314 = vmatprep.mubr.bf16.mxu0 0
        %315 = vmatmul.mubr.bf16.gmra.mrb[0].mxu0 %v217
        %v316 = vpop.f32.mrb[0].mxu0
        %v317 = vadd.f32 0.0, %v316
        %v318 = vpop.f32.mrb[0].mxu0
        %v319 = vpop.f32.mrb[0].mxu0
        %v320 = vpop.f32.mrb[0].mxu0
        %321 = vdwg.mxu0
        %v322 = vmul.f32 %v317, 0.5
        %v323 = vmul.f32 %v317, 0.044715
        %v324 = vmul.f32 %v323, %v317
        %v325 = vmul.f32 %v324, %v317
        %v326 = vadd.f32 %v317, %v325
        %v327 = vmul.f32 %v326, 0.7978846
        %v328 = vtanh.pop %v327
        %v329 = vadd.f32 %v328, 1.0
        %v330 = vmul.f32 %v322, %v329
        %v331 = vpack.c.bf16 %v330, %v330
        %v332 = vld [vmem:[#allocation7] sm:$0xf]
        %v333 = vld [vmem:[#allocation7 + $0x4] sm:$0xf]
        %v334 = vld [vmem:[#allocation7 + $0x8] sm:$0xf]
        %v335 = vld [vmem:[#allocation7 + $0xc] sm:$0xf]
        %v336 = vld [vmem:[#allocation7 + $0x10] sm:$0xf]
        %v337 = vld [vmem:[#allocation7 + $0x14] sm:$0xf]
        %v338 = vld [vmem:[#allocation7 + $0x18] sm:$0xf]
        %v339 = vld [vmem:[#allocation7 + $0x1c] sm:$0xf]
        %v340 = vld [vmem:[#allocation7 + $0x20] sm:$0xf]
        %v341 = vld [vmem:[#allocation7 + $0x24] sm:$0xf]
        %v342 = vld [vmem:[#allocation7 + $0x28] sm:$0xf]
        %v343 = vld [vmem:[#allocation7 + $0x2c] sm:$0xf]
        %v344 = vld [vmem:[#allocation7 + $0x30] sm:$0xf]
        %v345 = vld [vmem:[#allocation7 + $0x34] sm:$0xf]
        %v346 = vld [vmem:[#allocation7 + $0x38] sm:$0xf]
        %v347 = vld [vmem:[#allocation7 + $0x3c] sm:$0xf]
        %v364 = vunpack.c.l.b16 %v332
        %v365 = vunpack.c.l.b16 %v333
        %v366 = vunpack.c.l.b16 %v334
        %v367 = vunpack.c.l.b16 %v335
        %v368 = vunpack.c.l.b16 %v336
        %v369 = vunpack.c.l.b16 %v337
        %v370 = vunpack.c.l.b16 %v338
        %v371 = vunpack.c.l.b16 %v339
        %v372 = vunpack.c.l.b16 %v340
        %v373 = vunpack.c.l.b16 %v341
        %v374 = vunpack.c.l.b16 %v342
        %v375 = vunpack.c.l.b16 %v343
        %v376 = vunpack.c.l.b16 %v344
        %v377 = vunpack.c.l.b16 %v345
        %v378 = vunpack.c.l.b16 %v346
        %v379 = vunpack.c.l.b16 %v347
        %v380 = vpack.c.b16 %v365, %v364
        %v381 = vpack.c.b16 %v367, %v366
        %v382 = vpack.c.b16 %v369, %v368
        %v383 = vpack.c.b16 %v371, %v370
        %v384 = vpack.c.b16 %v373, %v372
        %v385 = vpack.c.b16 %v375, %v374
        %v386 = vpack.c.b16 %v377, %v376
        %v387 = vpack.c.b16 %v379, %v378
        %396 = vmatprep.subr.bf16.mxu0 0
        %397 = vmatpush1.bf16.msra.mxu0 %v380
        %398 = vmatprep.subr.bf16.mxu0 0
        %399 = vmatpush1.bf16.msra.mxu0 %v381
        %400 = vmatprep.subr.bf16.mxu0 0
        %401 = vmatpush1.bf16.msra.mxu0 %v382
        %402 = vmatprep.subr.bf16.mxu0 0
        %403 = vmatpush1.bf16.msra.mxu0 %v383
        %404 = vmatprep.subr.bf16.mxu0 0
        %405 = vmatpush1.bf16.msra.mxu0 %v384
        %406 = vmatprep.subr.bf16.mxu0 0
        %407 = vmatpush1.bf16.msra.mxu0 %v385
        %408 = vmatprep.subr.bf16.mxu0 0
        %409 = vmatpush1.bf16.msra.mxu0 %v386
        %410 = vmatprep.subr.bf16.mxu0 0
        %411 = vmatpush1.bf16.msra.mxu0 %v387
        %412 = vmatprep.subr.bf16.mxu0 0
        %413 = vmatpush1.bf16.msra.mxu0 0
        %414 = vmatprep.subr.bf16.mxu0 0
        %415 = vmatpush1.bf16.msra.mxu0 0
        %416 = vmatprep.subr.bf16.mxu0 0
        %417 = vmatpush1.bf16.msra.mxu0 0
        %418 = vmatprep.subr.bf16.mxu0 0
        %419 = vmatpush1.bf16.msra.mxu0 0
        %420 = vmatprep.subr.bf16.mxu0 0
        %421 = vmatpush1.bf16.msra.mxu0 0
        %422 = vmatprep.subr.bf16.mxu0 0
        %423 = vmatpush1.bf16.msra.mxu0 0
        %424 = vmatprep.subr.bf16.mxu0 0
        %425 = vmatpush1.bf16.msra.mxu0 0
        %426 = vmatprep.subr.bf16.mxu0 0
        %427 = vmatpush1.bf16.msra.mxu0 0
        %428 = vmatprep.mubr.bf16.mxu0 0
        %429 = vmatmul.mubr.bf16.gmra.mrb[0].mxu0 %v331
        %v430 = vpop.f32.mrb[0].mxu0
        %v431 = vadd.f32 0.0, %v430
        %v432 = vpop.f32.mrb[0].mxu0
        %v433 = vpop.f32.mrb[0].mxu0
        %v434 = vpop.f32.mrb[0].mxu0
        %435 = vdwg.mxu0
        %436 = vst [vmem:[%s214] sm:$0xff] %v431
        %s437 = sand.u32 %s97, 1
        %s438 = scalar_lea.sflag [#allocation4], %s437
        %s439 = sand.u32 %s97, 1
        %s440 = smul.addr %s439, 8
        %s441 = scalar_lea.vmem [#allocation8], %s440
        // Predicated region
        $region45: #{tpu_custom_call.1} parent=31 // pred_check
          %p442 = pneg %p107
        $region46: #{tpu_custom_call.1} parent=31 // pred_check_branch
          %444 = sbr.rel (%p442) target = $region48
        $region47: #{tpu_custom_call.1} parent=31 // pred_region
          %s446 = ssub.s32 128, 128
          %447 = vsyncadd %s438, %s446
          %s448 = smul.addr %s21, 128
          %s449 = scalar_lea.hbm %s3, %s448
          %s451 = sshll.u32 %s441, 4
          %s452 = int_to_ptr.vmem [resolvable:$true] %s451
          %454 = dma.vmem_to_hbm [thread:$0]  %s452, 128, %s449, %s438
        $region48: #{tpu_custom_call.1} parent=31 // pred_fallthru
          _
      $region32: #{tpu_custom_call.1} parent=5 // pred_fallthru
        _
      %p455 = scmp.le.s32.totalorder 2, %s16
      // Predicated region
      $region49: #{tpu_custom_call.1} parent=5 // pred_check
        %p456 = pneg %p455
      $region50: #{tpu_custom_call.1} parent=5 // pred_check_branch
        %458 = sbr.rel (%p456) target = $region52
      $region51: #{tpu_custom_call.1} parent=5 // pred_region
        %s459 = ssub.s32 %s16, 2
        // Predicated region
        $region53: #{tpu_custom_call.1} parent=51 // pred_check
          %p460 = pneg %p113
        $region54: #{tpu_custom_call.1} parent=51 // pred_check_branch
          %462 = sbr.rel (%p460) target = $region56
        $region55: #{tpu_custom_call.1} parent=51 // pred_region
          %s463 = sand.u32 %s98, 1
          %s464 = scalar_lea.sflag [#allocation4], %s463
          %s465 = sand.u32 %s98, 1
          %s466 = smul.addr %s465, 8
          %s467 = scalar_lea.vmem [#allocation8], %s466
          %468 = dma.done %s464, 128
        $region56: #{tpu_custom_call.1} parent=51 // pred_fallthru
          _
      $region52: #{tpu_custom_call.1} parent=5 // pred_fallthru
        _
    $region6: #{tpu_custom_call.1} parent=1 // loop_footer
      %s20 = sadd.s32 1, %s16
    $region7: #{tpu_custom_call.1} parent=1 // loop_footer_branch
      %15 = sbr.rel target = $region3
    $region8: #{tpu_custom_call.1} parent=1 // loop_exit
      _
    %469 = vsyncpa [#allocation3], 1
    %s470 = scalar_lea.sflag [#allocation3], 1
    %471 = vsyncpa %s470, 1
    %472 = vsyncpa [#allocation6], 1
    %473 = vsyncpa [#allocation4], 1
    %s474 = scalar_lea.sflag [#allocation4], 1
    %475 = vsyncpa %s474, 1

</llo_original>
